<compile_context>
chip_gen: v5e
topology: v5e:2x2
jax: 0.10.0
libtpu: 0.0.40
codegen_flags: <defaults>
</compile_context>

<pallas_src>
import jax
import jax.numpy as jnp
from jax.experimental import pallas as pl
from jax.experimental.pallas import tpu as pltpu

TB_MAX = 2048   # max batch-tile rows per grid step (sweepable; keep a multiple of 16)
K_IN = 189      # input features (unpadded; 189 == full array dim is a legal block dim)


def _round_up(n, m):
    return ((n + m - 1) // m) * m


# ---------------------------------------------------------------------------
# Kernel body: one batch tile (tb rows) through all 5 layers.
#   x_ref  : (tb, 189)  f32   (cast to bf16 in-kernel)
#   w1..w4 : (in, out)  bf16  (VMEM-resident across grid steps)
#   b1..b4 : (1, out)   f32
#   w5     : (32, 1)    f32   (fc5 weight column, used on the VPU)
#   b5     : (1, 1)     f32
#   o_ref  : (1, 1, tb) f32   (lane-dense: batch rows along lanes)
# ---------------------------------------------------------------------------
def mlp_kernel(x_ref,
               w1_ref, b1_ref,
               w2_ref, b2_ref,
               w3_ref, b3_ref,
               w4_ref, b4_ref,
               w5_ref, b5_ref,
               o_ref):
    x = x_ref[...].astype(jnp.bfloat16)

    def layer(h, w_ref, b_ref):
        # bf16 MXU matmul, f32 accumulate; bias add + ReLU in f32 (v5e-safe).
        acc = jnp.dot(h, w_ref[...], preferred_element_type=jnp.float32)
        return jnp.maximum(acc + b_ref[...], 0.0)

    h = layer(x, w1_ref, b1_ref).astype(jnp.bfloat16)   # (tb, 256)
    h = layer(h, w2_ref, b2_ref).astype(jnp.bfloat16)   # (tb, 128)
    h = layer(h, w3_ref, b3_ref).astype(jnp.bfloat16)   # (tb, 64)
    h = layer(h, w4_ref, b4_ref)                        # (tb, 32) f32 (feeds VPU fc5)

    # fc5 (K=32, N=1): keep it off the MXU.  Transpose the activations so the per-row
    # result lands lane-dense (batch along lanes), then VPU multiply + sublane reduce.
    ht = h.T                                                              # (32, tb) f32
    y = jnp.sum(ht * w5_ref[...], axis=0, keepdims=True) + b5_ref[...]    # (1, tb)
    o_ref[...] = y.reshape(1, 1, y.shape[-1])


# ---------------------------------------------------------------------------
# Wrapper: choose tile size, (minimally) pad batch, build grid/BlockSpecs, call, unpack.
# ---------------------------------------------------------------------------
def simple_nn_forward(x, params, *, tb_max=TB_MAX):
    """x: (B, 189) float32. params: list of (w, b); w: (in, out) f32, b: (1, out) f32."""
    B, K = x.shape
    assert K == K_IN, K
    (w1, b1), (w2, b2), (w3, b3), (w4, b4), (w5, b5) = params

    # --- adaptive batch tile ---
    tb = min(tb_max, _round_up(B, 16))
    # v7x: two TensorCores split the "parallel" grid axis; if one tile would cover a large
    # batch, split it in two so both cores get work.
    if pl.cdiv(B, tb) == 1 and B > 256:
        tb = _round_up(pl.cdiv(B, 2), 16)
    n_tiles = pl.cdiv(B, tb)
    B_pad = n_tiles * tb

    # Zero-pad the batch dim only when needed (no feature-dim pad / dtype pre-pass over x).
    if B_pad != B:
        x = jnp.pad(x, ((0, B_pad - B), (0, 0)))

    # Weights are tiny (~366 KB): cast matmul operands to bf16 once here.
    w1b = w1.astype(jnp.bfloat16)
    w2b = w2.astype(jnp.bfloat16)
    w3b = w3.astype(jnp.bfloat16)
    w4b = w4.astype(jnp.bfloat16)
    w5_col = w5.reshape(32, 1).astype(jnp.float32)
    b5_2d = b5.reshape(1, 1).astype(jnp.float32)

    const = lambda i: (0, 0)   # resident weights/biases: same block every grid step

    grid_spec = pltpu.PrefetchScalarGridSpec(
        num_scalar_prefetch=0,
        grid=(n_tiles,),
        in_specs=[
            pl.BlockSpec((tb, K_IN), lambda i: (i, 0)),   # x: streamed f32 batch tiles
            pl.BlockSpec((K_IN, 256), const),             # w1
            pl.BlockSpec((1, 256), const),                # b1
            pl.BlockSpec((256, 128), const),              # w2
            pl.BlockSpec((1, 128), const),                # b2
            pl.BlockSpec((128, 64), const),               # w3
            pl.BlockSpec((1, 64), const),                 # b3
            pl.BlockSpec((64, 32), const),                # w4
            pl.BlockSpec((1, 32), const),                 # b4
            pl.BlockSpec((32, 1), const),                 # w5 as a column
            pl.BlockSpec((1, 1), const),                  # b5
        ],
        out_specs=pl.BlockSpec((1, 1, tb), lambda i: (i, 0, 0)),
    )

    # Advisory cost estimate for the XLA scheduler.
    flops = 2 * B_pad * (K_IN * 256 + 256 * 128 + 128 * 64 + 64 * 32 + 32 * 1)
    weight_bytes = (w1b.size + w2b.size + w3b.size + w4b.size) * 2 \
        + (b1.size + b2.size + b3.size + b4.size + w5_col.size + b5_2d.size) * 4
    bytes_accessed = B_pad * K_IN * 4 + B_pad * 4 + weight_bytes
    cost = pl.CostEstimate(flops=flops, transcendentals=0, bytes_accessed=bytes_accessed)

    out = pl.pallas_call(
        mlp_kernel,
        out_shape=jax.ShapeDtypeStruct((n_tiles, 1, tb), jnp.float32),
        grid_spec=grid_spec,
        compiler_params=pltpu.CompilerParams(
            dimension_semantics=("parallel",),          # v7x: 2 TCs split the batch tiles
            vmem_limit_bytes=32 * 1024 * 1024,          # fits all generations incl. v7x
        ),
        cost_estimate=cost,
    )(x, w1b, b1, w2b, b2, w3b, b3, w4b, b4, w5_col, b5_2d)

    # (n_tiles, 1, tb) row-major == batch order; drop padded rows.
    return out.reshape(-1)[:B].reshape(B, 1)


# ---------------------------------------------------------------------------
# Deterministic parameter init (PyTorch nn.Linear style: U(-1/sqrt(fan_in), +1/sqrt(fan_in)))
# ---------------------------------------------------------------------------
def init_params(key):
    sizes = [(189, 256), (256, 128), (128, 64), (64, 32), (32, 1)]
    params = []
    for fan_in, fan_out in sizes:
        kw, kb, key = jax.random.split(key, 3)
        bound = 1.0 / (fan_in ** 0.5)
        # stored as (in, out) == transpose of PyTorch's (out, in) weight
        w = jax.random.uniform(kw, (fan_in, fan_out), jnp.float32, -bound, bound)
        b = jax.random.uniform(kb, (1, fan_out), jnp.float32, -bound, bound)
        params.append((w, b))
    return params


def reference_forward_f32(x, params):
    h = x
    for i, (w, b) in enumerate(params):
        h = h @ w + b
        if i < len(params) - 1:
            h = jnp.maximum(h, 0.0)
    return h


def reference_forward_mixed(x, params):
    """Same bf16-matmul / f32-accumulate / f32-epilogue mix as the kernel."""
    (w1, b1), (w2, b2), (w3, b3), (w4, b4), (w5, b5) = params
    h = x.astype(jnp.bfloat16)
    for w, b in [(w1, b1), (w2, b2), (w3, b3)]:
        h = jnp.maximum(jnp.dot(h, w.astype(jnp.bfloat16),
                                preferred_element_type=jnp.float32) + b, 0.0)
        h = h.astype(jnp.bfloat16)
    h = jnp.maximum(jnp.dot(h, w4.astype(jnp.bfloat16),
                            preferred_element_type=jnp.float32) + b4, 0.0)   # f32
    return jnp.sum(h * w5.reshape(1, 32), axis=-1, keepdims=True) + b5.reshape(1, 1)


if __name__ == "__main__":
    key = jax.random.PRNGKey(0)
    kx, kp = jax.random.split(key)

    B = 8
    x = jax.random.normal(kx, (B, 189), dtype=jnp.float32)
    params = init_params(kp)

    out = jax.block_until_ready(simple_nn_forward(x, params))
    assert out.shape == (B, 1), out.shape

    # Tight check against a reference using the exact same bf16/f32 mix.
    ref_mixed = reference_forward_mixed(x, params)
    assert jnp.allclose(out, ref_mixed, atol=2e-3, rtol=2e-3), \
        f"mismatch vs mixed-precision reference: {jnp.max(jnp.abs(out - ref_mixed))}"

    # Loose check against the pure-f32 PyTorch-equivalent forward (bf16 matmul noise).
    ref_f32 = reference_forward_f32(x, params)
    assert jnp.allclose(out, ref_f32, atol=5e-2, rtol=5e-2), \
        f"mismatch vs f32 reference: {jnp.max(jnp.abs(out - ref_f32))}"

    # Exercise the multi-tile + batch-padding path (small forced tile).
    B2 = 40
    x2 = jax.random.normal(jax.random.PRNGKey(1), (B2, 189), dtype=jnp.float32)
    out2 = jax.block_until_ready(simple_nn_forward(x2, params, tb_max=16))
    ref2 = reference_forward_mixed(x2, params)
    assert out2.shape == (B2, 1), out2.shape
    assert jnp.allclose(out2, ref2, atol=2e-3, rtol=2e-3), \
        f"multi-tile mismatch: {jnp.max(jnp.abs(out2 - ref2))}"

    print("KERNEL_OK")
</pallas_src>

<mosaic_0001>
module attributes {stable_mosaic.version = 11 : i64} {
  func.func @mlp_kernel(%arg0: i32, %arg1: memref<16x189xf32, #tpu.memory_space<vmem>>, %arg2: memref<189x256xbf16, #tpu.memory_space<vmem>>, %arg3: memref<1x256xf32, #tpu.memory_space<vmem>>, %arg4: memref<256x128xbf16, #tpu.memory_space<vmem>>, %arg5: memref<1x128xf32, #tpu.memory_space<vmem>>, %arg6: memref<128x64xbf16, #tpu.memory_space<vmem>>, %arg7: memref<1x64xf32, #tpu.memory_space<vmem>>, %arg8: memref<64x32xbf16, #tpu.memory_space<vmem>>, %arg9: memref<1x32xf32, #tpu.memory_space<vmem>>, %arg10: memref<32x1xf32, #tpu.memory_space<vmem>>, %arg11: memref<1x1xf32, #tpu.memory_space<vmem>>, %arg12: memref<1x1x16xf32, #tpu.memory_space<vmem>>) attributes {dimension_semantics = [#tpu.dimension_semantics<parallel>], iteration_bounds = array<i64: 1>, scalar_prefetch = 0 : i64, scratch_operands = 0 : i64, tpu.core_type = #tpu.core_type<tc>, window_params = [{transform_indices = @transform_0, window_bounds = array<i64: 16, 189>}, {pipeline_mode = #tpu.pipeline_mode<synchronous>, transform_indices = @transform_1, window_bounds = array<i64: 189, 256>}, {pipeline_mode = #tpu.pipeline_mode<synchronous>, transform_indices = @transform_2, window_bounds = array<i64: 1, 256>}, {pipeline_mode = #tpu.pipeline_mode<synchronous>, transform_indices = @transform_3, window_bounds = array<i64: 256, 128>}, {pipeline_mode = #tpu.pipeline_mode<synchronous>, transform_indices = @transform_4, window_bounds = array<i64: 1, 128>}, {pipeline_mode = #tpu.pipeline_mode<synchronous>, transform_indices = @transform_5, window_bounds = array<i64: 128, 64>}, {pipeline_mode = #tpu.pipeline_mode<synchronous>, transform_indices = @transform_6, window_bounds = array<i64: 1, 64>}, {pipeline_mode = #tpu.pipeline_mode<synchronous>, transform_indices = @transform_7, window_bounds = array<i64: 64, 32>}, {pipeline_mode = #tpu.pipeline_mode<synchronous>, transform_indices = @transform_8, window_bounds = array<i64: 1, 32>}, {pipeline_mode = #tpu.pipeline_mode<synchronous>, transform_indices = @transform_9, window_bounds = array<i64: 32, 1>}, {pipeline_mode = #tpu.pipeline_mode<synchronous>, transform_indices = @transform_10, window_bounds = array<i64: 1, 1>}, {transform_indices = @transform_11, window_bounds = array<i64: 1, 1, 16>}]} {
    %c0 = arith.constant 0 : index
    %c0_0 = arith.constant 0 : index
    %0 = vector.load %arg1[%c0, %c0_0] : memref<16x189xf32, #tpu.memory_space<vmem>>, vector<16x189xf32>
    %1 = arith.truncf %0 : vector<16x189xf32> to vector<16x189xbf16>
    %c0_1 = arith.constant 0 : index
    %c0_2 = arith.constant 0 : index
    %2 = vector.load %arg2[%c0_1, %c0_2] : memref<189x256xbf16, #tpu.memory_space<vmem>>, vector<189x256xbf16>
    %cst = arith.constant dense<0.000000e+00> : vector<16x256xf32>
    %3 = tpu.matmul %1, %2, %cst {dimension_numbers = #tpu.dot_dimension_numbers<[1], [0], [0], [1], [0, 0, 1, 1], [], []>} : vector<16x189xbf16>, vector<189x256xbf16>, vector<16x256xf32> -> vector<16x256xf32>
    %c0_3 = arith.constant 0 : index
    %c0_4 = arith.constant 0 : index
    %4 = vector.load %arg3[%c0_3, %c0_4] : memref<1x256xf32, #tpu.memory_space<vmem>>, vector<1x256xf32>
    %5 = vector.broadcast %4 : vector<1x256xf32> to vector<16x256xf32>
    %6 = arith.addf %3, %5 : vector<16x256xf32>
    %cst_5 = arith.constant 0.000000e+00 : f32
    %7 = vector.broadcast %cst_5 : f32 to vector<16x256xf32>
    %8 = arith.maximumf %6, %7 : vector<16x256xf32>
    %9 = arith.truncf %8 : vector<16x256xf32> to vector<16x256xbf16>
    %c0_6 = arith.constant 0 : index
    %c0_7 = arith.constant 0 : index
    %10 = vector.load %arg4[%c0_6, %c0_7] : memref<256x128xbf16, #tpu.memory_space<vmem>>, vector<256x128xbf16>
    %cst_8 = arith.constant dense<0.000000e+00> : vector<16x128xf32>
    %11 = tpu.matmul %9, %10, %cst_8 {dimension_numbers = #tpu.dot_dimension_numbers<[1], [0], [0], [1], [0, 0, 1, 1], [], []>} : vector<16x256xbf16>, vector<256x128xbf16>, vector<16x128xf32> -> vector<16x128xf32>
    %c0_9 = arith.constant 0 : index
    %c0_10 = arith.constant 0 : index
    %12 = vector.load %arg5[%c0_9, %c0_10] : memref<1x128xf32, #tpu.memory_space<vmem>>, vector<1x128xf32>
    %13 = vector.broadcast %12 : vector<1x128xf32> to vector<16x128xf32>
    %14 = arith.addf %11, %13 : vector<16x128xf32>
    %cst_11 = arith.constant 0.000000e+00 : f32
    %15 = vector.broadcast %cst_11 : f32 to vector<16x128xf32>
    %16 = arith.maximumf %14, %15 : vector<16x128xf32>
    %17 = arith.truncf %16 : vector<16x128xf32> to vector<16x128xbf16>
    %c0_12 = arith.constant 0 : index
    %c0_13 = arith.constant 0 : index
    %18 = vector.load %arg6[%c0_12, %c0_13] : memref<128x64xbf16, #tpu.memory_space<vmem>>, vector<128x64xbf16>
    %cst_14 = arith.constant dense<0.000000e+00> : vector<16x64xf32>
    %19 = tpu.matmul %17, %18, %cst_14 {dimension_numbers = #tpu.dot_dimension_numbers<[1], [0], [0], [1], [0, 0, 1, 1], [], []>} : vector<16x128xbf16>, vector<128x64xbf16>, vector<16x64xf32> -> vector<16x64xf32>
    %c0_15 = arith.constant 0 : index
    %c0_16 = arith.constant 0 : index
    %20 = vector.load %arg7[%c0_15, %c0_16] : memref<1x64xf32, #tpu.memory_space<vmem>>, vector<1x64xf32>
    %21 = vector.broadcast %20 : vector<1x64xf32> to vector<16x64xf32>
    %22 = arith.addf %19, %21 : vector<16x64xf32>
    %cst_17 = arith.constant 0.000000e+00 : f32
    %23 = vector.broadcast %cst_17 : f32 to vector<16x64xf32>
    %24 = arith.maximumf %22, %23 : vector<16x64xf32>
    %25 = arith.truncf %24 : vector<16x64xf32> to vector<16x64xbf16>
    %c0_18 = arith.constant 0 : index
    %c0_19 = arith.constant 0 : index
    %26 = vector.load %arg8[%c0_18, %c0_19] : memref<64x32xbf16, #tpu.memory_space<vmem>>, vector<64x32xbf16>
    %cst_20 = arith.constant dense<0.000000e+00> : vector<16x32xf32>
    %27 = tpu.matmul %25, %26, %cst_20 {dimension_numbers = #tpu.dot_dimension_numbers<[1], [0], [0], [1], [0, 0, 1, 1], [], []>} : vector<16x64xbf16>, vector<64x32xbf16>, vector<16x32xf32> -> vector<16x32xf32>
    %c0_21 = arith.constant 0 : index
    %c0_22 = arith.constant 0 : index
    %28 = vector.load %arg9[%c0_21, %c0_22] : memref<1x32xf32, #tpu.memory_space<vmem>>, vector<1x32xf32>
    %29 = vector.broadcast %28 : vector<1x32xf32> to vector<16x32xf32>
    %30 = arith.addf %27, %29 : vector<16x32xf32>
    %cst_23 = arith.constant 0.000000e+00 : f32
    %31 = vector.broadcast %cst_23 : f32 to vector<16x32xf32>
    %32 = arith.maximumf %30, %31 : vector<16x32xf32>
    %33 = tpu.transpose %32, [1, 0] : vector<16x32xf32> -> vector<32x16xf32>
    %c0_24 = arith.constant 0 : index
    %c0_25 = arith.constant 0 : index
    %34 = vector.load %arg10[%c0_24, %c0_25] : memref<32x1xf32, #tpu.memory_space<vmem>>, vector<32x1xf32>
    %35 = vector.broadcast %34 : vector<32x1xf32> to vector<32x16xf32>
    %36 = arith.mulf %33, %35 : vector<32x16xf32>
    %cst_26 = arith.constant dense<0.000000e+00> : vector<16xf32>
    %37 = vector.multi_reduction <add>, %36, %cst_26 [0] : vector<32x16xf32> to vector<16xf32>
    %38 = vector.shape_cast %37 : vector<16xf32> to vector<1x16xf32>
    %c0_27 = arith.constant 0 : index
    %c0_28 = arith.constant 0 : index
    %39 = vector.load %arg11[%c0_27, %c0_28] : memref<1x1xf32, #tpu.memory_space<vmem>>, vector<1x1xf32>
    %40 = vector.broadcast %39 : vector<1x1xf32> to vector<1x16xf32>
    %41 = arith.addf %38, %40 : vector<1x16xf32>
    %42 = vector.shape_cast %41 : vector<1x16xf32> to vector<1x1x16xf32>
    %c0_29 = arith.constant 0 : index
    %c0_30 = arith.constant 0 : index
    %c0_31 = arith.constant 0 : index
    %43 = vector.load %arg12[%c0_29, %c0_30, %c0_31] : memref<1x1x16xf32, #tpu.memory_space<vmem>>, vector<1x1x16xf32>
    tpu.vector_store %arg12[%c0_29, %c0_30, %c0_31], %42 {strides = array<i32>} : memref<1x1x16xf32, #tpu.memory_space<vmem>>, vector<1x1x16xf32>,
    return
  }
  func.func @transform_0(%arg0: i32) -> (i32, i32) {
    %c0_i32 = arith.constant 0 : i32
    %c0_i32_0 = arith.constant 0 : i32
    return %arg0, %c0_i32 : i32, i32
  }
  func.func @transform_1(%arg0: i32) -> (i32, i32) {
    %c0_i32 = arith.constant 0 : i32
    %c0_i32_0 = arith.constant 0 : i32
    %c0_i32_1 = arith.constant 0 : i32
    return %c0_i32, %c0_i32_0 : i32, i32
  }
  func.func @transform_2(%arg0: i32) -> (i32, i32) {
    %c0_i32 = arith.constant 0 : i32
    %c0_i32_0 = arith.constant 0 : i32
    %c0_i32_1 = arith.constant 0 : i32
    return %c0_i32, %c0_i32_0 : i32, i32
  }
  func.func @transform_3(%arg0: i32) -> (i32, i32) {
    %c0_i32 = arith.constant 0 : i32
    %c0_i32_0 = arith.constant 0 : i32
    %c0_i32_1 = arith.constant 0 : i32
    return %c0_i32, %c0_i32_0 : i32, i32
  }
  func.func @transform_4(%arg0: i32) -> (i32, i32) {
    %c0_i32 = arith.constant 0 : i32
    %c0_i32_0 = arith.constant 0 : i32
    %c0_i32_1 = arith.constant 0 : i32
    return %c0_i32, %c0_i32_0 : i32, i32
  }
  func.func @transform_5(%arg0: i32) -> (i32, i32) {
    %c0_i32 = arith.constant 0 : i32
    %c0_i32_0 = arith.constant 0 : i32
    %c0_i32_1 = arith.constant 0 : i32
    return %c0_i32, %c0_i32_0 : i32, i32
  }
  func.func @transform_6(%arg0: i32) -> (i32, i32) {
    %c0_i32 = arith.constant 0 : i32
    %c0_i32_0 = arith.constant 0 : i32
    %c0_i32_1 = arith.constant 0 : i32
    return %c0_i32, %c0_i32_0 : i32, i32
  }
  func.func @transform_7(%arg0: i32) -> (i32, i32) {
    %c0_i32 = arith.constant 0 : i32
    %c0_i32_0 = arith.constant 0 : i32
    %c0_i32_1 = arith.constant 0 : i32
    return %c0_i32, %c0_i32_0 : i32, i32
  }
  func.func @transform_8(%arg0: i32) -> (i32, i32) {
    %c0_i32 = arith.constant 0 : i32
    %c0_i32_0 = arith.constant 0 : i32
    %c0_i32_1 = arith.constant 0 : i32
    return %c0_i32, %c0_i32_0 : i32, i32
  }
  func.func @transform_9(%arg0: i32) -> (i32, i32) {
    %c0_i32 = arith.constant 0 : i32
    %c0_i32_0 = arith.constant 0 : i32
    %c0_i32_1 = arith.constant 0 : i32
    return %c0_i32, %c0_i32_0 : i32, i32
  }
  func.func @transform_10(%arg0: i32) -> (i32, i32) {
    %c0_i32 = arith.constant 0 : i32
    %c0_i32_0 = arith.constant 0 : i32
    %c0_i32_1 = arith.constant 0 : i32
    return %c0_i32, %c0_i32_0 : i32, i32
  }
  func.func @transform_11(%arg0: i32) -> (i32, i32, i32) {
    %c0_i32 = arith.constant 0 : i32
    %c0_i32_0 = arith.constant 0 : i32
    %c0_i32_1 = arith.constant 0 : i32
    return %arg0, %c0_i32, %c0_i32_0 : i32, i32, i32
  }
}

</mosaic_0001>

<llo_original>
// kernel: tpu_custom_call.1
$region0: #{tpu_custom_call.1}
  #allocation0 [shape = 'u32[]', space=smem, size = 0x4, offset = 0x4, fixed_abs, tag = 'smem constant byte address 0x4 - core index']
  #allocation1 [shape = 'u32[72,128]{1,0:T(1,128)}', space=vmem, size = 0x9000, scoped, tag = 'internal scratch']
  #allocation2 [shape = 'f32[1,1]{1,0:T(1,128)S(1)}', space=vmem, size = 0x200, scoped, tag = 'scoped memory for tpu_custom_call.1']
  %s0 = inlined_call_operand.hbm [shape: f32[16,189], index: 0, kind: input, shape index: {}]
  %s1 = inlined_call_operand.hbm [shape: bf16[189,256], index: 1, kind: input, shape index: {}]
  %s2 = inlined_call_operand.vmem [shape: f32[1,256], index: 2, kind: input, shape index: {}]
  %s3 = inlined_call_operand.vmem [shape: bf16[256,128], index: 3, kind: input, shape index: {}]
  %s4 = inlined_call_operand.vmem [shape: f32[1,128], index: 4, kind: input, shape index: {}]
  %s5 = inlined_call_operand.vmem [shape: bf16[128,64], index: 5, kind: input, shape index: {}]
  %s6 = inlined_call_operand.vmem [shape: f32[1,64], index: 6, kind: input, shape index: {}]
  %s7 = inlined_call_operand.vmem [shape: bf16[64,32], index: 7, kind: input, shape index: {}]
  %s8 = inlined_call_operand.vmem [shape: f32[1,32], index: 8, kind: input, shape index: {}]
  %s9 = inlined_call_operand.vmem [shape: f32[32,1], index: 9, kind: input, shape index: {}]
  %s10 = inlined_call_operand.<no memory space> [shape: f32[1,1], index: 10, kind: input, shape index: {}]
  %s11 = inlined_call_operand.hbm [shape: f32[1,1,16], index: 11, kind: output, shape index: {}]
  %s12 = sld [smem:[#allocation0]]
  $region62: #{tpu_custom_call.1} parent=0
    _
  %s14 = ssub.s32 1, %s12
  %s15 = scalar_select 0, %s14, %s12
  %v16 = vstv %s10
  %17 = vst [vmem:[#allocation2] sm:$0x1] %v16
  $region1: #{tpu_custom_call.1} parent=0
    #allocation3 [shape = 'u8[16384]{0}', space=vmem, size = 0x4000, scoped, tag = 'input window, operand 0, single buffered']
    #allocation4 [shape = 's32[1]{0}', space=sflag, size = 0x4, scoped, tag = 'scoped memory for tpu_custom_call.1']
    #allocation5 [shape = 's32[1]{0}', space=sflag, size = 0x4, scoped, tag = 'scoped memory for tpu_custom_call.1']
    #allocation6 [shape = 'u8[98304]{0}', space=vmem, size = 0x18000, scoped, tag = 'input window, operand 1, single buffered']
    #allocation7 [shape = 's32[1]{0}', space=sflag, size = 0x4, scoped, tag = 'scoped memory for tpu_custom_call.1']
    #allocation8 [shape = 'u8[512]{0}', space=vmem, size = 0x400, scoped, tag = 'output window, operand 0, single buffered']
    %18 = vsyncpa [#allocation4], 0
    %19 = vsyncpa [#allocation7], 0
    %20 = vsyncpa [#allocation5], 0
    // Predicated region
    $region2: #{tpu_custom_call.1} parent=1 // pred_check
      _
    $region3: #{tpu_custom_call.1} parent=1 // pred_check_branch
      %22 = sbr.rel (0) target = $region5
    $region4: #{tpu_custom_call.1} parent=1 // pred_region
      %24 = vsyncadd [#allocation4], 0
      %s25 = sshll.u32 %s0, 4
      %s26 = int_to_ptr.hbm [resolvable:$true] %s25
      %s27 = sshll.u32 [#allocation3], 4
      %s28 = int_to_ptr.vmem [resolvable:$true] %s27
      %33 = dma.hbm_to_vmem [thread:$0]  %s26, 512, %s28, [#allocation4], 256, 256, 16
    $region5: #{tpu_custom_call.1} parent=1 // pred_fallthru
      _
    // Predicated region
    $region6: #{tpu_custom_call.1} parent=1 // pred_check
      _
    $region7: #{tpu_custom_call.1} parent=1 // pred_check_branch
      %35 = sbr.rel (0) target = $region9
    $region8: #{tpu_custom_call.1} parent=1 // pred_region
      %37 = vsyncadd [#allocation7], 0
      %s38 = sshll.u32 %s1, 4
      %s39 = int_to_ptr.hbm [resolvable:$true] %s38
      %s40 = sshll.u32 [#allocation6], 4
      %s41 = int_to_ptr.vmem [resolvable:$true] %s40
      %46 = dma.hbm_to_vmem [thread:$0]  %s39, 3072, %s41, [#allocation7], 128, 128, 8
    $region9: #{tpu_custom_call.1} parent=1 // pred_fallthru
      _
    // Predicated region
    $region10: #{tpu_custom_call.1} parent=1 // pred_check
      _
    $region11: #{tpu_custom_call.1} parent=1 // pred_check_branch
      %48 = sbr.rel (0) target = $region13
    $region12: #{tpu_custom_call.1} parent=1 // pred_region
      _
    $region13: #{tpu_custom_call.1} parent=1 // pred_fallthru
      _
    // Predicated region
    $region14: #{tpu_custom_call.1} parent=1 // pred_check
      _
    $region15: #{tpu_custom_call.1} parent=1 // pred_check_branch
      %50 = sbr.rel (0) target = $region17
    $region16: #{tpu_custom_call.1} parent=1 // pred_region
      _
    $region17: #{tpu_custom_call.1} parent=1 // pred_fallthru
      _
    // Predicated region
    $region18: #{tpu_custom_call.1} parent=1 // pred_check
      _
    $region19: #{tpu_custom_call.1} parent=1 // pred_check_branch
      %52 = sbr.rel (0) target = $region21
    $region20: #{tpu_custom_call.1} parent=1 // pred_region
      _
    $region21: #{tpu_custom_call.1} parent=1 // pred_fallthru
      _
    // Predicated region
    $region22: #{tpu_custom_call.1} parent=1 // pred_check
      _
    $region23: #{tpu_custom_call.1} parent=1 // pred_check_branch
      %54 = sbr.rel (0) target = $region25
    $region24: #{tpu_custom_call.1} parent=1 // pred_region
      _
    $region25: #{tpu_custom_call.1} parent=1 // pred_fallthru
      _
    // Predicated region
    $region26: #{tpu_custom_call.1} parent=1 // pred_check
      _
    $region27: #{tpu_custom_call.1} parent=1 // pred_check_branch
      %56 = sbr.rel (0) target = $region29
    $region28: #{tpu_custom_call.1} parent=1 // pred_region
      _
    $region29: #{tpu_custom_call.1} parent=1 // pred_fallthru
      _
    // Predicated region
    $region30: #{tpu_custom_call.1} parent=1 // pred_check
      _
    $region31: #{tpu_custom_call.1} parent=1 // pred_check_branch
      %58 = sbr.rel (0) target = $region33
    $region32: #{tpu_custom_call.1} parent=1 // pred_region
      _
    $region33: #{tpu_custom_call.1} parent=1 // pred_fallthru
      _
    // Predicated region
    $region34: #{tpu_custom_call.1} parent=1 // pred_check
      _
    $region35: #{tpu_custom_call.1} parent=1 // pred_check_branch
      %60 = sbr.rel (0) target = $region37
    $region36: #{tpu_custom_call.1} parent=1 // pred_region
      _
    $region37: #{tpu_custom_call.1} parent=1 // pred_fallthru
      _
    // Predicated region
    $region38: #{tpu_custom_call.1} parent=1 // pred_check
      _
    $region39: #{tpu_custom_call.1} parent=1 // pred_check_branch
      %62 = sbr.rel (0) target = $region41
    $region40: #{tpu_custom_call.1} parent=1 // pred_region
      _
    $region41: #{tpu_custom_call.1} parent=1 // pred_fallthru
      _
    // Predicated region
    $region42: #{tpu_custom_call.1} parent=1 // pred_check
      _
    $region43: #{tpu_custom_call.1} parent=1 // pred_check_branch
      %64 = sbr.rel (0) target = $region45
    $region44: #{tpu_custom_call.1} parent=1 // pred_region
      _
    $region45: #{tpu_custom_call.1} parent=1 // pred_fallthru
      _
    // Predicated region
    $region46: #{tpu_custom_call.1} parent=1 // pred_check
      _
    $region47: #{tpu_custom_call.1} parent=1 // pred_check_branch
      %66 = sbr.rel (0) target = $region49
    $region48: #{tpu_custom_call.1} parent=1 // pred_region
      %68 = dma.done [#allocation4], 512
    $region49: #{tpu_custom_call.1} parent=1 // pred_fallthru
      _
    // Predicated region
    $region50: #{tpu_custom_call.1} parent=1 // pred_check
      _
    $region51: #{tpu_custom_call.1} parent=1 // pred_check_branch
      %70 = sbr.rel (0) target = $region53
    $region52: #{tpu_custom_call.1} parent=1 // pred_region
      %72 = dma.done [#allocation7], 3072
    $region53: #{tpu_custom_call.1} parent=1 // pred_fallthru
      _
    %v74 = vld [vmem:[#allocation3] sm:$0xff]
    %v75 = vld [vmem:[#allocation3 + $0x8] sm:$0xff]
    %v76 = vld [vmem:[#allocation3 + $0x10] sm:$0xff]
    %v77 = vld [vmem:[#allocation3 + $0x18] sm:$0xff]
    %v78 = vpack.c.bf16 %v76, %v74
    %v79 = vpack.c.bf16 %v77, %v75
    %v80 = vld [vmem:[#allocation6] sm:$0xff]
    %v81 = vld [vmem:[#allocation6 + $0x8] sm:$0xff]
    %v82 = vld [vmem:[#allocation6 + $0x10] sm:$0xff]
    %v83 = vld [vmem:[#allocation6 + $0x18] sm:$0xff]
    %v84 = vld [vmem:[#allocation6 + $0x20] sm:$0xff]
    %v85 = vld [vmem:[#allocation6 + $0x28] sm:$0xff]
    %v86 = vld [vmem:[#allocation6 + $0x30] sm:$0xff]
    %v87 = vld [vmem:[#allocation6 + $0x38] sm:$0xff]
    %v88 = vld [vmem:[#allocation6 + $0x40] sm:$0xff]
    %v89 = vld [vmem:[#allocation6 + $0x48] sm:$0xff]
    %v90 = vld [vmem:[#allocation6 + $0x50] sm:$0xff]
    %v91 = vld [vmem:[#allocation6 + $0x58] sm:$0xff]
    %v92 = vld [vmem:[#allocation6 + $0x60] sm:$0xff]
    %v93 = vld [vmem:[#allocation6 + $0x68] sm:$0xff]
    %v94 = vld [vmem:[#allocation6 + $0x70] sm:$0xff]
    %v95 = vld [vmem:[#allocation6 + $0x78] sm:$0xff]
    %v96 = vld [vmem:[#allocation6 + $0x80] sm:$0xff]
    %v97 = vld [vmem:[#allocation6 + $0x88] sm:$0xff]
    %v98 = vld [vmem:[#allocation6 + $0x90] sm:$0xff]
    %v99 = vld [vmem:[#allocation6 + $0x98] sm:$0xff]
    %v100 = vld [vmem:[#allocation6 + $0xa0] sm:$0xff]
    %v101 = vld [vmem:[#allocation6 + $0xa8] sm:$0xff]
    %v102 = vld [vmem:[#allocation6 + $0xb0] sm:$0xff]
    %v103 = vld [vmem:[#allocation6 + $0xb8] sm:$0x77]
    %v104 = vld [vmem:[%s2] sm:$0x3]
    %v106 = vperm.slane %v104, 0
    %v107 = vperm.slane %v104, 1
    %v134 = vunpack.c.l.b16 %v80
    %v135 = vunpack.c.h.b16 %v80
    %v136 = vunpack.c.l.b16 %v81
    %v137 = vunpack.c.h.b16 %v81
    %v138 = vunpack.c.l.b16 %v82
    %v139 = vunpack.c.h.b16 %v82
    %v140 = vunpack.c.l.b16 %v83
    %v141 = vunpack.c.h.b16 %v83
    %v142 = vunpack.c.l.b16 %v84
    %v143 = vunpack.c.h.b16 %v84
    %v144 = vunpack.c.l.b16 %v85
    %v145 = vunpack.c.h.b16 %v85
    %v146 = vunpack.c.l.b16 %v86
    %v147 = vunpack.c.h.b16 %v86
    %v148 = vunpack.c.l.b16 %v87
    %v149 = vunpack.c.h.b16 %v87
    %v150 = vunpack.c.l.b16 %v88
    %v151 = vunpack.c.h.b16 %v88
    %v152 = vunpack.c.l.b16 %v89
    %v153 = vunpack.c.h.b16 %v89
    %v154 = vunpack.c.l.b16 %v90
    %v155 = vunpack.c.h.b16 %v90
    %v156 = vunpack.c.l.b16 %v91
    %v157 = vunpack.c.h.b16 %v91
    %v158 = vunpack.c.l.b16 %v92
    %v159 = vunpack.c.h.b16 %v92
    %v160 = vunpack.c.l.b16 %v93
    %v161 = vunpack.c.h.b16 %v93
    %v162 = vunpack.c.l.b16 %v94
    %v163 = vunpack.c.h.b16 %v94
    %v164 = vunpack.c.l.b16 %v95
    %v165 = vunpack.c.h.b16 %v95
    %v166 = vunpack.c.l.b16 %v96
    %v167 = vunpack.c.h.b16 %v96
    %v168 = vunpack.c.l.b16 %v97
    %v169 = vunpack.c.h.b16 %v97
    %v170 = vunpack.c.l.b16 %v98
    %v171 = vunpack.c.h.b16 %v98
    %v172 = vunpack.c.l.b16 %v99
    %v173 = vunpack.c.h.b16 %v99
    %v174 = vunpack.c.l.b16 %v100
    %v175 = vunpack.c.h.b16 %v100
    %v176 = vunpack.c.l.b16 %v101
    %v177 = vunpack.c.h.b16 %v101
    %v178 = vunpack.c.l.b16 %v102
    %v179 = vunpack.c.h.b16 %v102
    %v180 = vunpack.c.l.b16 %v103
    %v181 = vunpack.c.h.b16 %v103
    %v182 = vpack.c.b16 %v136, %v134
    %v183 = vpack.c.b16 %v137, %v135
    %v184 = vpack.c.b16 %v140, %v138
    %v185 = vpack.c.b16 %v141, %v139
    %v186 = vpack.c.b16 %v144, %v142
    %v187 = vpack.c.b16 %v145, %v143
    %v188 = vpack.c.b16 %v148, %v146
    %v189 = vpack.c.b16 %v149, %v147
    %v190 = vpack.c.b16 %v152, %v150
    %v191 = vpack.c.b16 %v153, %v151
    %v192 = vpack.c.b16 %v156, %v154
    %v193 = vpack.c.b16 %v157, %v155
    %v194 = vpack.c.b16 %v160, %v158
    %v195 = vpack.c.b16 %v161, %v159
    %v196 = vpack.c.b16 %v164, %v162
    %v197 = vpack.c.b16 %v165, %v163
    %v198 = vpack.c.b16 %v168, %v166
    %v199 = vpack.c.b16 %v169, %v167
    %v200 = vpack.c.b16 %v172, %v170
    %v201 = vpack.c.b16 %v173, %v171
    %v202 = vpack.c.b16 %v176, %v174
    %v203 = vpack.c.b16 %v177, %v175
    %v204 = vpack.c.b16 %v180, %v178
    %v205 = vpack.c.b16 %v181, %v179
    %vm228 = vcmask 498688
    %v230 = vsel %vm228, %v79, 0
    %vm232 = vcmask 1045504
    %vm233 = vcmask 1046528
    %v234 = vsel %vm232, 4294967295, 65535
    %v235 = vsel %vm233, %v234, 0
    %v237 = vand.u32 %v204, %v235
    %v240 = vand.u32 %v205, %v235
    %242 = vmatpush.bf16.msra.mxu0 %v196
    %243 = vmatpush.bf16.msra.mxu0 %v194
    %244 = vmatpush.bf16.msra.mxu0 %v192
    %245 = vmatpush.bf16.msra.mxu0 %v190
    %246 = vmatpush.bf16.msra.mxu0 %v188
    %247 = vmatpush.bf16.msra.mxu0 %v186
    %248 = vmatpush.bf16.msra.mxu0 %v184
    %249 = vmatpush.bf16.msra.mxu0 %v182
    %250 = vmatmul.bf16.gmra.mxu0 %v78
    %v251 = vpop.f32.mrf.mxu0
    %v252 = vadd.f32 %v106, %v251
    %v253 = vpop.f32.mrf.mxu0
    %v254 = vadd.f32 %v106, %v253
    %255 = vdwg.mxu0
    %256 = vmatpush.bf16.msra.mxu0 0
    %257 = vmatpush.bf16.msra.mxu0 0
    %258 = vmatpush.bf16.msra.mxu0 0
    %259 = vmatpush.bf16.msra.mxu0 0
    %260 = vmatpush.bf16.msra.mxu0 %v237
    %261 = vmatpush.bf16.msra.mxu0 %v202
    %262 = vmatpush.bf16.msra.mxu0 %v200
    %263 = vmatpush.bf16.msra.mxu0 %v198
    %264 = vmatmul.bf16.gmra.mxu0 %v230
    %v265 = vpop.f32.mrf.mxu0
    %v266 = vadd.f32 %v252, %v265
    %v267 = vpop.f32.mrf.mxu0
    %v268 = vadd.f32 %v254, %v267
    %269 = vdwg.mxu0
    %270 = vmatpush.bf16.msra.mxu0 %v197
    %271 = vmatpush.bf16.msra.mxu0 %v195
    %272 = vmatpush.bf16.msra.mxu0 %v193
    %273 = vmatpush.bf16.msra.mxu0 %v191
    %274 = vmatpush.bf16.msra.mxu0 %v189
    %275 = vmatpush.bf16.msra.mxu0 %v187
    %276 = vmatpush.bf16.msra.mxu0 %v185
    %277 = vmatpush.bf16.msra.mxu0 %v183
    %278 = vmatmul.bf16.gmra.mxu0 %v78
    %v279 = vpop.f32.mrf.mxu0
    %v280 = vadd.f32 %v107, %v279
    %v281 = vpop.f32.mrf.mxu0
    %v282 = vadd.f32 %v107, %v281
    %283 = vdwg.mxu0
    %284 = vmatpush.bf16.msra.mxu0 0
    %285 = vmatpush.bf16.msra.mxu0 0
    %286 = vmatpush.bf16.msra.mxu0 0
    %287 = vmatpush.bf16.msra.mxu0 0
    %288 = vmatpush.bf16.msra.mxu0 %v240
    %289 = vmatpush.bf16.msra.mxu0 %v203
    %290 = vmatpush.bf16.msra.mxu0 %v201
    %291 = vmatpush.bf16.msra.mxu0 %v199
    %292 = vmatmul.bf16.gmra.mxu0 %v230
    %v293 = vpop.f32.mrf.mxu0
    %v294 = vadd.f32 %v280, %v293
    %v295 = vpop.f32.mrf.mxu0
    %v296 = vadd.f32 %v282, %v295
    %297 = vdwg.mxu0
    %v298 = vmax.f32 %v266, 0.0
    %v299 = vmax.f32 %v294, 0.0
    %v300 = vmax.f32 %v268, 0.0
    %v301 = vmax.f32 %v296, 0.0
    %v302 = vpack.c.bf16 %v300, %v298
    %v303 = vpack.c.bf16 %v301, %v299
    %v304 = vld [vmem:[%s3] sm:$0xf]
    %v305 = vld [vmem:[%s3 + $0x4] sm:$0xf]
    %v306 = vld [vmem:[%s3 + $0x8] sm:$0xf]
    %v307 = vld [vmem:[%s3 + $0xc] sm:$0xf]
    %v308 = vld [vmem:[%s3 + $0x10] sm:$0xf]
    %v309 = vld [vmem:[%s3 + $0x14] sm:$0xf]
    %v310 = vld [vmem:[%s3 + $0x18] sm:$0xf]
    %v311 = vld [vmem:[%s3 + $0x1c] sm:$0xf]
    %v312 = vld [vmem:[%s3 + $0x20] sm:$0xf]
    %v313 = vld [vmem:[%s3 + $0x24] sm:$0xf]
    %v314 = vld [vmem:[%s3 + $0x28] sm:$0xf]
    %v315 = vld [vmem:[%s3 + $0x2c] sm:$0xf]
    %v316 = vld [vmem:[%s3 + $0x30] sm:$0xf]
    %v317 = vld [vmem:[%s3 + $0x34] sm:$0xf]
    %v318 = vld [vmem:[%s3 + $0x38] sm:$0xf]
    %v319 = vld [vmem:[%s3 + $0x3c] sm:$0xf]
    %v320 = vld [vmem:[%s3 + $0x40] sm:$0xf]
    %v321 = vld [vmem:[%s3 + $0x44] sm:$0xf]
    %v322 = vld [vmem:[%s3 + $0x48] sm:$0xf]
    %v323 = vld [vmem:[%s3 + $0x4c] sm:$0xf]
    %v324 = vld [vmem:[%s3 + $0x50] sm:$0xf]
    %v325 = vld [vmem:[%s3 + $0x54] sm:$0xf]
    %v326 = vld [vmem:[%s3 + $0x58] sm:$0xf]
    %v327 = vld [vmem:[%s3 + $0x5c] sm:$0xf]
    %v328 = vld [vmem:[%s3 + $0x60] sm:$0xf]
    %v329 = vld [vmem:[%s3 + $0x64] sm:$0xf]
    %v330 = vld [vmem:[%s3 + $0x68] sm:$0xf]
    %v331 = vld [vmem:[%s3 + $0x6c] sm:$0xf]
    %v332 = vld [vmem:[%s3 + $0x70] sm:$0xf]
    %v333 = vld [vmem:[%s3 + $0x74] sm:$0xf]
    %v334 = vld [vmem:[%s3 + $0x78] sm:$0xf]
    %v335 = vld [vmem:[%s3 + $0x7c] sm:$0xf]
    %v336 = vld [vmem:[%s4] sm:$0x1]
    %v338 = vperm.slane %v336, 0
    %v372 = vunpack.c.l.b16 %v304
    %v373 = vunpack.c.l.b16 %v305
    %v374 = vunpack.c.l.b16 %v306
    %v375 = vunpack.c.l.b16 %v307
    %v376 = vunpack.c.l.b16 %v308
    %v377 = vunpack.c.l.b16 %v309
    %v378 = vunpack.c.l.b16 %v310
    %v379 = vunpack.c.l.b16 %v311
    %v380 = vunpack.c.l.b16 %v312
    %v381 = vunpack.c.l.b16 %v313
    %v382 = vunpack.c.l.b16 %v314
    %v383 = vunpack.c.l.b16 %v315
    %v384 = vunpack.c.l.b16 %v316
    %v385 = vunpack.c.l.b16 %v317
    %v386 = vunpack.c.l.b16 %v318
    %v387 = vunpack.c.l.b16 %v319
    %v388 = vunpack.c.l.b16 %v320
    %v389 = vunpack.c.l.b16 %v321
    %v390 = vunpack.c.l.b16 %v322
    %v391 = vunpack.c.l.b16 %v323
    %v392 = vunpack.c.l.b16 %v324
    %v393 = vunpack.c.l.b16 %v325
    %v394 = vunpack.c.l.b16 %v326
    %v395 = vunpack.c.l.b16 %v327
    %v396 = vunpack.c.l.b16 %v328
    %v397 = vunpack.c.l.b16 %v329
    %v398 = vunpack.c.l.b16 %v330
    %v399 = vunpack.c.l.b16 %v331
    %v400 = vunpack.c.l.b16 %v332
    %v401 = vunpack.c.l.b16 %v333
    %v402 = vunpack.c.l.b16 %v334
    %v403 = vunpack.c.l.b16 %v335
    %v404 = vpack.c.b16 %v373, %v372
    %v405 = vpack.c.b16 %v375, %v374
    %v406 = vpack.c.b16 %v377, %v376
    %v407 = vpack.c.b16 %v379, %v378
    %v408 = vpack.c.b16 %v381, %v380
    %v409 = vpack.c.b16 %v383, %v382
    %v410 = vpack.c.b16 %v385, %v384
    %v411 = vpack.c.b16 %v387, %v386
    %v412 = vpack.c.b16 %v389, %v388
    %v413 = vpack.c.b16 %v391, %v390
    %v414 = vpack.c.b16 %v393, %v392
    %v415 = vpack.c.b16 %v395, %v394
    %v416 = vpack.c.b16 %v397, %v396
    %v417 = vpack.c.b16 %v399, %v398
    %v418 = vpack.c.b16 %v401, %v400
    %v419 = vpack.c.b16 %v403, %v402
    %436 = vmatpush.bf16.msra.mxu0 %v411
    %437 = vmatpush.bf16.msra.mxu0 %v410
    %438 = vmatpush.bf16.msra.mxu0 %v409
    %439 = vmatpush.bf16.msra.mxu0 %v408
    %440 = vmatpush.bf16.msra.mxu0 %v407
    %441 = vmatpush.bf16.msra.mxu0 %v406
    %442 = vmatpush.bf16.msra.mxu0 %v405
    %443 = vmatpush.bf16.msra.mxu0 %v404
    %444 = vmatmul.bf16.gmra.mxu0 %v302
    %v445 = vpop.f32.mrf.mxu0
    %v446 = vadd.f32 %v338, %v445
    %v447 = vpop.f32.mrf.mxu0
    %v448 = vadd.f32 %v338, %v447
    %449 = vdwg.mxu0
    %450 = vmatpush.bf16.msra.mxu0 %v419
    %451 = vmatpush.bf16.msra.mxu0 %v418
    %452 = vmatpush.bf16.msra.mxu0 %v417
    %453 = vmatpush.bf16.msra.mxu0 %v416
    %454 = vmatpush.bf16.msra.mxu0 %v415
    %455 = vmatpush.bf16.msra.mxu0 %v414
    %456 = vmatpush.bf16.msra.mxu0 %v413
    %457 = vmatpush.bf16.msra.mxu0 %v412
    %458 = vmatmul.bf16.gmra.mxu0 %v303
    %v459 = vpop.f32.mrf.mxu0
    %v460 = vadd.f32 %v446, %v459
    %v461 = vpop.f32.mrf.mxu0
    %v462 = vadd.f32 %v448, %v461
    %463 = vdwg.mxu0
    %v464 = vmax.f32 %v460, 0.0
    %v465 = vmax.f32 %v462, 0.0
    %v466 = vpack.c.bf16 %v465, %v464
    %v467 = vld [vmem:[%s5] sm:$0xf]
    %v468 = vld [vmem:[%s5 + $0x4] sm:$0xf]
    %v469 = vld [vmem:[%s5 + $0x8] sm:$0xf]
    %v470 = vld [vmem:[%s5 + $0xc] sm:$0xf]
    %v471 = vld [vmem:[%s5 + $0x10] sm:$0xf]
    %v472 = vld [vmem:[%s5 + $0x14] sm:$0xf]
    %v473 = vld [vmem:[%s5 + $0x18] sm:$0xf]
    %v474 = vld [vmem:[%s5 + $0x1c] sm:$0xf]
    %v475 = vld [vmem:[%s5 + $0x20] sm:$0xf]
    %v476 = vld [vmem:[%s5 + $0x24] sm:$0xf]
    %v477 = vld [vmem:[%s5 + $0x28] sm:$0xf]
    %v478 = vld [vmem:[%s5 + $0x2c] sm:$0xf]
    %v479 = vld [vmem:[%s5 + $0x30] sm:$0xf]
    %v480 = vld [vmem:[%s5 + $0x34] sm:$0xf]
    %v481 = vld [vmem:[%s5 + $0x38] sm:$0xf]
    %v482 = vld [vmem:[%s5 + $0x3c] sm:$0xf]
    %v483 = vld [vmem:[%s6] sm:$0x1]
    %v485 = vperm.slane %v483, 0
    %v503 = vunpack.c.l.b16 %v467
    %v504 = vunpack.c.l.b16 %v468
    %v505 = vunpack.c.l.b16 %v469
    %v506 = vunpack.c.l.b16 %v470
    %v507 = vunpack.c.l.b16 %v471
    %v508 = vunpack.c.l.b16 %v472
    %v509 = vunpack.c.l.b16 %v473
    %v510 = vunpack.c.l.b16 %v474
    %v511 = vunpack.c.l.b16 %v475
    %v512 = vunpack.c.l.b16 %v476
    %v513 = vunpack.c.l.b16 %v477
    %v514 = vunpack.c.l.b16 %v478
    %v515 = vunpack.c.l.b16 %v479
    %v516 = vunpack.c.l.b16 %v480
    %v517 = vunpack.c.l.b16 %v481
    %v518 = vunpack.c.l.b16 %v482
    %v519 = vpack.c.b16 %v504, %v503
    %v520 = vpack.c.b16 %v506, %v505
    %v521 = vpack.c.b16 %v508, %v507
    %v522 = vpack.c.b16 %v510, %v509
    %v523 = vpack.c.b16 %v512, %v511
    %v524 = vpack.c.b16 %v514, %v513
    %v525 = vpack.c.b16 %v516, %v515
    %v526 = vpack.c.b16 %v518, %v517
    %535 = vmatpush.bf16.msra.mxu0 %v526
    %536 = vmatpush.bf16.msra.mxu0 %v525
    %537 = vmatpush.bf16.msra.mxu0 %v524
    %538 = vmatpush.bf16.msra.mxu0 %v523
    %539 = vmatpush.bf16.msra.mxu0 %v522
    %540 = vmatpush.bf16.msra.mxu0 %v521
    %541 = vmatpush.bf16.msra.mxu0 %v520
    %542 = vmatpush.bf16.msra.mxu0 %v519
    %543 = vmatmul.bf16.gmra.mxu0 %v466
    %v544 = vpop.f32.mrf.mxu0
    %v545 = vadd.f32 %v485, %v544
    %v546 = vpop.f32.mrf.mxu0
    %v547 = vadd.f32 %v485, %v546
    %548 = vdwg.mxu0
    %v549 = vmax.f32 %v545, 0.0
    %v550 = vmax.f32 %v547, 0.0
    %v551 = vpack.c.bf16 %v550, %v549
    %v552 = vld [vmem:[%s7] sm:$0xf]
    %v553 = vld [vmem:[%s7 + $0x4] sm:$0xf]
    %v554 = vld [vmem:[%s7 + $0x8] sm:$0xf]
    %v555 = vld [vmem:[%s7 + $0xc] sm:$0xf]
    %v556 = vld [vmem:[%s7 + $0x10] sm:$0xf]
    %v557 = vld [vmem:[%s7 + $0x14] sm:$0xf]
    %v558 = vld [vmem:[%s7 + $0x18] sm:$0xf]
    %v559 = vld [vmem:[%s7 + $0x1c] sm:$0xf]
    %v560 = vld [vmem:[%s8] sm:$0x1]
    %v562 = vperm.slane %v560, 0
    %v572 = vunpack.c.l.b16 %v552
    %v573 = vunpack.c.l.b16 %v553
    %v574 = vunpack.c.l.b16 %v554
    %v575 = vunpack.c.l.b16 %v555
    %v576 = vunpack.c.l.b16 %v556
    %v577 = vunpack.c.l.b16 %v557
    %v578 = vunpack.c.l.b16 %v558
    %v579 = vunpack.c.l.b16 %v559
    %v580 = vpack.c.b16 %v573, %v572
    %v581 = vpack.c.b16 %v575, %v574
    %v582 = vpack.c.b16 %v577, %v576
    %v583 = vpack.c.b16 %v579, %v578
    %vm588 = vcmask 523264
    %v590 = vsel %vm588, %v551, 0
    %592 = vmatpush.bf16.msra.mxu0 0
    %593 = vmatpush.bf16.msra.mxu0 0
    %594 = vmatpush.bf16.msra.mxu0 0
    %595 = vmatpush.bf16.msra.mxu0 0
    %596 = vmatpush.bf16.msra.mxu0 %v583
    %597 = vmatpush.bf16.msra.mxu0 %v582
    %598 = vmatpush.bf16.msra.mxu0 %v581
    %599 = vmatpush.bf16.msra.mxu0 %v580
    %600 = vmatmul.bf16.gmra.mxu0 %v590
    %v601 = vpop.f32.mrf.mxu0
    %v602 = vadd.f32 %v562, %v601
    %v603 = vpop.f32.mrf.mxu0
    %v604 = vadd.f32 %v562, %v603
    %605 = vdwg.mxu0
    %v606 = vmax.f32 %v602, 0.0
    %v607 = vmax.f32 %v604, 0.0
    %608 = vxpose.xlu0.b32.start [1/16] %v606, 128
    %609 = vxpose.xlu0.b32.cont [2/16] %v607, 128
    %610 = vxpose.xlu0.b32.cont [3/16] 0.0, 128
    %611 = vxpose.xlu0.b32.cont [4/16] 0.0, 128
    %612 = vxpose.xlu0.b32.cont [5/16] 0.0, 128
    %613 = vxpose.xlu0.b32.cont [6/16] 0.0, 128
    %614 = vxpose.xlu0.b32.cont [7/16] 0.0, 128
    %615 = vxpose.xlu0.b32.cont [8/16] 0.0, 128
    %616 = vxpose.xlu0.b32.cont [9/16] 0.0, 128
    %617 = vxpose.xlu0.b32.cont [10/16] 0.0, 128
    %618 = vxpose.xlu0.b32.cont [11/16] 0.0, 128
    %619 = vxpose.xlu0.b32.cont [12/16] 0.0, 128
    %620 = vxpose.xlu0.b32.cont [13/16] 0.0, 128
    %621 = vxpose.xlu0.b32.cont [14/16] 0.0, 128
    %622 = vxpose.xlu0.b32.cont [15/16] 0.0, 128
    %623 = vxpose.xlu0.b32.end [16/16] 0.0, 128
    %v624 = vpop.trf.xlu0
    %v625 = vpop.trf.xlu0
    %v626 = vpop.trf.xlu0
    %v627 = vpop.trf.xlu0
    %v628 = vpop.trf.xlu0
    %v629 = vpop.trf.xlu0
    %v630 = vpop.trf.xlu0
    %v631 = vpop.trf.xlu0
    %v632 = vpop.trf.xlu0
    %v633 = vpop.trf.xlu0
    %v634 = vpop.trf.xlu0
    %v635 = vpop.trf.xlu0
    %v636 = vpop.trf.xlu0
    %v637 = vpop.trf.xlu0
    %v638 = vpop.trf.xlu0
    %v639 = vpop.trf.xlu0
    %v640 = vld [vmem:[%s9] sm:$0xff]
    %v641 = vld [vmem:[%s9 + $0x8] sm:$0xff]
    %v642 = vld [vmem:[%s9 + $0x10] sm:$0xff]
    %v643 = vld [vmem:[%s9 + $0x18] sm:$0xff]
    %645 = vset.pattern.permute.xlu0 0
    %646 = vperm.xlu0 %645, %v640
    %v647 = vpop.permute.xlu0 %646
    %650 = vset.pattern.permute.xlu0 0
    %651 = vperm.xlu0 %650, %v641
    %v652 = vpop.permute.xlu0 %651
    %655 = vset.pattern.permute.xlu0 0
    %656 = vperm.xlu0 %655, %v642
    %v657 = vpop.permute.xlu0 %656
    %660 = vset.pattern.permute.xlu0 0
    %661 = vperm.xlu0 %660, %v643
    %v662 = vpop.permute.xlu0 %661
    %v664 = vmul.f32 %v624, %v647
    %v665 = vmul.f32 %v625, %v652
    %v666 = vmul.f32 %v626, %v657
    %v667 = vmul.f32 %v627, %v662
    %vm668 = vcmask 130048
    %v669 = vsel %vm668, %v664, 0.0
    %v670 = vsel %vm668, %v665, 0.0
    %v671 = vadd.f32 %v669, %v670
    %v672 = vsel %vm668, %v666, 0.0
    %v673 = vadd.f32 %v671, %v672
    %v674 = vsel %vm668, %v667, 0.0
    %v675 = vadd.f32 %v673, %v674
    %v676 = vrot.slane %v675, 4
    %v677 = vadd.f32 %v675, %v676
    %v678 = vrot.slane %v677, 2
    %v679 = vadd.f32 %v677, %v678
    %v680 = vrot.slane %v679, 1
    %v681 = vadd.f32 %v679, %v680
    %v682 = vld [vmem:[#allocation2] sm:$0x1]
    %684 = vset.pattern.permute.xlu0 0
    %685 = vperm.xlu0 %684, %v682
    %v686 = vpop.permute.xlu0 %685
    %v688 = vperm.slane %v686, 0
    %v689 = vadd.f32 %v681, %v688
    %vm690 = vcmask 122880
    %691 = vst.msk [vmem:[#allocation8] sm:$0x1] %vm690, %v689
    // Predicated region
    $region54: #{tpu_custom_call.1} parent=1 // pred_check
      _
    $region55: #{tpu_custom_call.1} parent=1 // pred_check_branch
      %693 = sbr.rel (0) target = $region57
    $region56: #{tpu_custom_call.1} parent=1 // pred_region
      %695 = vsyncadd [#allocation5], 0
      %s697 = sshll.u32 [#allocation8], 4
      %s698 = int_to_ptr.vmem [resolvable:$true] %s697
      %s699 = sshll.u32 %s11, 4
      %s700 = int_to_ptr.hbm [resolvable:$true] %s699
      %702 = dma.vmem_to_hbm [thread:$0]  %s698, 16, %s700, [#allocation5]
    $region57: #{tpu_custom_call.1} parent=1 // pred_fallthru
      _
    // Predicated region
    $region58: #{tpu_custom_call.1} parent=1 // pred_check
      _
    $region59: #{tpu_custom_call.1} parent=1 // pred_check_branch
      %704 = sbr.rel (0) target = $region61
    $region60: #{tpu_custom_call.1} parent=1 // pred_region
      %706 = dma.done [#allocation5], 16
    $region61: #{tpu_custom_call.1} parent=1 // pred_fallthru
      _
    %707 = vsyncpa [#allocation4], 1
    %708 = vsyncpa [#allocation7], 1
    %709 = vsyncpa [#allocation5], 1

</llo_original>
